<compile_context>
chip_gen: v5e
topology: v5e:2x2
jax: 0.10.0
libtpu: 0.0.40
codegen_flags: <defaults>
</compile_context>

<pallas_src>
import jax
import jax.numpy as jnp
from jax.experimental import pallas as pl
from jax.experimental.pallas import tpu as pltpu


def _make_kernel(C, H, W):
    HP, WP = H + 2, W + 2
    NP = HP * WP            # padded-flat spatial extent (lane axis)
    S = WP + 1              # max |flat tap shift|
    NW = NP + 2 * S         # wide width: NP plus zero side bands
    # Flat-axis slice offsets of the 9 taps, (dy, dx) row-major — must match
    # the (Cout, 9*Cin) weight matrix layout built in the wrapper.
    offsets = [S + (dy - 1) * WP + (dx - 1)
               for dy in range(3) for dx in range(3)]

    def kernel(x_ref, mask_ref, w1_ref, b1_ref, w2_ref, b2_ref,
               out_ref, xbig_ref, h1w_ref):
        # x_ref: (1, C, NW) f32 — zero-padded spatially + zero side bands.
        xw = x_ref[0]                                   # (C, NW) f32
        xwb = xw.astype(jnp.bfloat16)

        # ---- conv1: pack 9 contiguous lane-slices into (9C, NP), one matmul.
        for t, off in enumerate(offsets):
            xbig_ref[t * C:(t + 1) * C, :] = xwb[:, off:off + NP]
        h1 = jnp.dot(w1_ref[...], xbig_ref[...],
                     preferred_element_type=jnp.float32)        # (C, NP) f32
        # bias + ReLU, then zero the non-interior positions so conv2 sees the
        # same zero padding as PyTorch.
        h1 = jnp.maximum(h1 + b1_ref[...], 0.0) * mask_ref[...]

        # ---- "re-pad" h1: zero only the tiny side bands + one dense store.
        zband = jnp.zeros((C, S), jnp.bfloat16)
        h1w_ref[:, 0:S] = zband
        h1w_ref[:, S + NP:NW] = zband
        h1w_ref[:, S:S + NP] = h1.astype(jnp.bfloat16)

        # ---- conv2 (res_scale already folded into w2/b2 by the wrapper).
        for t, off in enumerate(offsets):
            xbig_ref[t * C:(t + 1) * C, :] = h1w_ref[:, off:off + NP]
        h2 = jnp.dot(w2_ref[...], xbig_ref[...],
                     preferred_element_type=jnp.float32) + b2_ref[...]

        # ---- residual add in f32; output minor dim = NP (lane dense).
        out_ref[0] = (xw[:, S:S + NP] + h2).astype(out_ref.dtype)

    return kernel, NP, S, NW


def residual_block_no_bn(x_nchw, w1, b1, w2, b2, res_scale=1.0):
    """x_nchw: (B, C, H, W) float32.  w1/w2: (3, 3, Cin, Cout).  Returns NCHW."""
    B, C, H, W = x_nchw.shape
    HP, WP = H + 2, W + 2
    # Pad channels to a sublane multiple so every im2col store is tile-aligned.
    Cp = -(-C // 8) * 8
    kernel, NP, S, NW = _make_kernel(Cp, H, W)

    # Single input stream: (optional) channel pad -> spatial zero pad ->
    # flatten to NP lanes -> add S-wide zero side bands so every tap is a
    # static in-bounds lane slice.
    x32 = x_nchw.astype(jnp.float32)
    if Cp != C:
        x32 = jnp.pad(x32, ((0, 0), (0, Cp - C), (0, 0), (0, 0)))
    xp = jnp.pad(x32, ((0, 0), (0, 0), (1, 1), (1, 1)))
    xw = jnp.pad(xp.reshape(B, Cp, NP), ((0, 0), (0, 0), (S, S)))

    # Interior mask on the padded-flat grid (1 = real pixel, 0 = pad pixel).
    q = jnp.arange(NP)
    rows, cols = q // WP, q % WP
    mask = (((rows >= 1) & (rows <= H) & (cols >= 1) & (cols <= W))
            .astype(jnp.float32).reshape(1, NP))

    def pad_w(w):
        w = w.astype(jnp.float32)
        if Cp != C:
            w = jnp.pad(w, ((0, 0), (0, 0), (0, Cp - C), (0, Cp - C)))
        return w

    def pad_b(b):
        b = b.astype(jnp.float32)
        if Cp != C:
            b = jnp.pad(b, ((0, Cp - C),))
        return b

    # Weights as (Cout, 9*Cin) bf16 for the MXU; K is tap-major, channel-minor
    # to match the kernel's im2col packing.  Fold res_scale into conv2.
    def wmat(w):
        return jnp.transpose(w, (3, 0, 1, 2)).reshape(Cp, 9 * Cp)

    w1m = wmat(pad_w(w1)).astype(jnp.bfloat16)
    w2m = wmat(pad_w(w2) * res_scale).astype(jnp.bfloat16)
    b1c = pad_b(b1).reshape(Cp, 1)
    b2c = (pad_b(b2) * res_scale).reshape(Cp, 1)

    out_flat = pl.pallas_call(
        kernel,
        out_shape=jax.ShapeDtypeStruct((B, Cp, NP), jnp.float32),
        grid_spec=pltpu.PrefetchScalarGridSpec(
            num_scalar_prefetch=0,
            grid=(B,),
            in_specs=[
                pl.BlockSpec((1, Cp, NW), lambda b: (b, 0, 0)),   # x (wide, f32)
                pl.BlockSpec((1, NP), lambda b: (0, 0)),          # interior mask
                pl.BlockSpec((Cp, 9 * Cp), lambda b: (0, 0)),     # W1 (bf16)
                pl.BlockSpec((Cp, 1), lambda b: (0, 0)),          # b1
                pl.BlockSpec((Cp, 9 * Cp), lambda b: (0, 0)),     # W2*scale
                pl.BlockSpec((Cp, 1), lambda b: (0, 0)),          # b2*scale
            ],
            out_specs=pl.BlockSpec((1, Cp, NP), lambda b: (b, 0, 0)),
            scratch_shapes=[
                pltpu.VMEM((9 * Cp, NP), jnp.bfloat16),   # im2col operand
                pltpu.VMEM((Cp, NW), jnp.bfloat16),       # widened h1
            ],
        ),
        compiler_params=pltpu.CompilerParams(
            dimension_semantics=("parallel",)),
    )(xw, mask, w1m, b1c, w2m, b2c)

    # Crop the 1-pixel border and padded channels -> NCHW.
    return out_flat.reshape(B, Cp, HP, WP)[:, :C, 1:H + 1, 1:W + 1]


def _init_params(key, num_feat, scale=0.1):
    """Deterministic stand-in for default_init_weights (kaiming_normal * 0.1,
    bias = 0).  Weights laid out as (3, 3, Cin, Cout)."""
    k1, k2 = jax.random.split(key)
    fan_in = num_feat * 3 * 3
    std = (2.0 / fan_in) ** 0.5
    w1 = jax.random.normal(k1, (3, 3, num_feat, num_feat), jnp.float32) * std * scale
    w2 = jax.random.normal(k2, (3, 3, num_feat, num_feat), jnp.float32) * std * scale
    b1 = jnp.zeros((num_feat,), jnp.float32)
    b2 = jnp.zeros((num_feat,), jnp.float32)
    return w1, b1, w2, b2


def _reference(x_nchw, w1, b1, w2, b2, res_scale):
    # Pure-JAX reference (lax conv), NCHW + OIHW, f32 throughout.
    w1_oihw = jnp.transpose(w1, (3, 2, 0, 1))
    w2_oihw = jnp.transpose(w2, (3, 2, 0, 1))
    c1 = jax.lax.conv_general_dilated(x_nchw, w1_oihw, (1, 1), ((1, 1), (1, 1)),
                                      dimension_numbers=("NCHW", "OIHW", "NCHW"))
    c1 = jnp.maximum(c1 + b1[None, :, None, None], 0.0)
    c2 = jax.lax.conv_general_dilated(c1, w2_oihw, (1, 1), ((1, 1), (1, 1)),
                                      dimension_numbers=("NCHW", "OIHW", "NCHW"))
    c2 = c2 + b2[None, :, None, None]
    return x_nchw + c2 * res_scale


if __name__ == "__main__":
    key = jax.random.PRNGKey(0)
    kx, kp = jax.random.split(key)

    B, C, H, W = 2, 4, 16, 16
    res_scale = 1.0

    x = jax.random.normal(kx, (B, C, H, W), jnp.float32)
    w1, b1, w2, b2 = _init_params(kp, C, scale=0.1)

    out = residual_block_no_bn(x, w1, b1, w2, b2, res_scale)
    out = jax.block_until_ready(out)

    ref = _reference(x, w1, b1, w2, b2, res_scale)
    assert out.shape == (B, C, H, W)
    # bf16 matmul inputs with f32 accumulation: loosen tolerance vs pure f32.
    assert jnp.allclose(out, ref, atol=5e-3, rtol=5e-3)

    print("KERNEL_OK")
</pallas_src>

<mosaic_0001>
module attributes {stable_mosaic.version = 11 : i64} {
  func.func @kernel(%arg0: i32, %arg1: memref<1x8x362xf32, #tpu.memory_space<vmem>>, %arg2: memref<1x324xf32, #tpu.memory_space<vmem>>, %arg3: memref<8x72xbf16, #tpu.memory_space<vmem>>, %arg4: memref<8x1xf32, #tpu.memory_space<vmem>>, %arg5: memref<8x72xbf16, #tpu.memory_space<vmem>>, %arg6: memref<8x1xf32, #tpu.memory_space<vmem>>, %arg7: memref<1x8x324xf32, #tpu.memory_space<vmem>>, %arg8: memref<72x324xbf16, #tpu.memory_space<vmem>>, %arg9: memref<8x362xbf16, #tpu.memory_space<vmem>>) attributes {dimension_semantics = [#tpu.dimension_semantics<parallel>], iteration_bounds = array<i64: 2>, scalar_prefetch = 0 : i64, scratch_operands = 2 : i64, tpu.core_type = #tpu.core_type<tc>, window_params = [{transform_indices = @transform_0, window_bounds = array<i64: 1, 8, 362>}, {pipeline_mode = #tpu.pipeline_mode<synchronous>, transform_indices = @transform_1, window_bounds = array<i64: 1, 324>}, {pipeline_mode = #tpu.pipeline_mode<synchronous>, transform_indices = @transform_2, window_bounds = array<i64: 8, 72>}, {pipeline_mode = #tpu.pipeline_mode<synchronous>, transform_indices = @transform_3, window_bounds = array<i64: 8, 1>}, {pipeline_mode = #tpu.pipeline_mode<synchronous>, transform_indices = @transform_4, window_bounds = array<i64: 8, 72>}, {pipeline_mode = #tpu.pipeline_mode<synchronous>, transform_indices = @transform_5, window_bounds = array<i64: 8, 1>}, {transform_indices = @transform_6, window_bounds = array<i64: 1, 8, 324>}]} {
    %c0 = arith.constant 0 : index
    %c0_0 = arith.constant 0 : index
    %c0_1 = arith.constant 0 : index
    %0 = vector.load %arg1[%c0, %c0_0, %c0_1] : memref<1x8x362xf32, #tpu.memory_space<vmem>>, vector<1x8x362xf32>
    %1 = vector.shape_cast %0 : vector<1x8x362xf32> to vector<8x362xf32>
    %2 = arith.truncf %1 : vector<8x362xf32> to vector<8x362xbf16>
    %3 = vector.extract_strided_slice %2 {offsets = [0, 0], sizes = [8, 324], strides = [1, 1]} : vector<8x362xbf16> to vector<8x324xbf16>
    %c0_2 = arith.constant 0 : index
    %c0_3 = arith.constant 0 : index
    %4 = vector.load %arg8[%c0_2, %c0_3] : memref<72x324xbf16, #tpu.memory_space<vmem>>, vector<8x324xbf16>
    tpu.vector_store %arg8[%c0_2, %c0_3], %3 {strides = array<i32>} : memref<72x324xbf16, #tpu.memory_space<vmem>>, vector<8x324xbf16>,
    %5 = vector.extract_strided_slice %2 {offsets = [0, 1], sizes = [8, 324], strides = [1, 1]} : vector<8x362xbf16> to vector<8x324xbf16>
    %c8 = arith.constant 8 : index
    %c0_4 = arith.constant 0 : index
    %6 = vector.load %arg8[%c8, %c0_4] : memref<72x324xbf16, #tpu.memory_space<vmem>>, vector<8x324xbf16>
    tpu.vector_store %arg8[%c8, %c0_4], %5 {strides = array<i32>} : memref<72x324xbf16, #tpu.memory_space<vmem>>, vector<8x324xbf16>,
    %7 = vector.extract_strided_slice %2 {offsets = [0, 2], sizes = [8, 324], strides = [1, 1]} : vector<8x362xbf16> to vector<8x324xbf16>
    %c16 = arith.constant 16 : index
    %c0_5 = arith.constant 0 : index
    %8 = vector.load %arg8[%c16, %c0_5] : memref<72x324xbf16, #tpu.memory_space<vmem>>, vector<8x324xbf16>
    tpu.vector_store %arg8[%c16, %c0_5], %7 {strides = array<i32>} : memref<72x324xbf16, #tpu.memory_space<vmem>>, vector<8x324xbf16>,
    %9 = vector.extract_strided_slice %2 {offsets = [0, 18], sizes = [8, 324], strides = [1, 1]} : vector<8x362xbf16> to vector<8x324xbf16>
    %c24 = arith.constant 24 : index
    %c0_6 = arith.constant 0 : index
    %10 = vector.load %arg8[%c24, %c0_6] : memref<72x324xbf16, #tpu.memory_space<vmem>>, vector<8x324xbf16>
    tpu.vector_store %arg8[%c24, %c0_6], %9 {strides = array<i32>} : memref<72x324xbf16, #tpu.memory_space<vmem>>, vector<8x324xbf16>,
    %11 = vector.extract_strided_slice %2 {offsets = [0, 19], sizes = [8, 324], strides = [1, 1]} : vector<8x362xbf16> to vector<8x324xbf16>
    %c32 = arith.constant 32 : index
    %c0_7 = arith.constant 0 : index
    %12 = vector.load %arg8[%c32, %c0_7] : memref<72x324xbf16, #tpu.memory_space<vmem>>, vector<8x324xbf16>
    tpu.vector_store %arg8[%c32, %c0_7], %11 {strides = array<i32>} : memref<72x324xbf16, #tpu.memory_space<vmem>>, vector<8x324xbf16>,
    %13 = vector.extract_strided_slice %2 {offsets = [0, 20], sizes = [8, 324], strides = [1, 1]} : vector<8x362xbf16> to vector<8x324xbf16>
    %c40 = arith.constant 40 : index
    %c0_8 = arith.constant 0 : index
    %14 = vector.load %arg8[%c40, %c0_8] : memref<72x324xbf16, #tpu.memory_space<vmem>>, vector<8x324xbf16>
    tpu.vector_store %arg8[%c40, %c0_8], %13 {strides = array<i32>} : memref<72x324xbf16, #tpu.memory_space<vmem>>, vector<8x324xbf16>,
    %15 = vector.extract_strided_slice %2 {offsets = [0, 36], sizes = [8, 324], strides = [1, 1]} : vector<8x362xbf16> to vector<8x324xbf16>
    %c48 = arith.constant 48 : index
    %c0_9 = arith.constant 0 : index
    %16 = vector.load %arg8[%c48, %c0_9] : memref<72x324xbf16, #tpu.memory_space<vmem>>, vector<8x324xbf16>
    tpu.vector_store %arg8[%c48, %c0_9], %15 {strides = array<i32>} : memref<72x324xbf16, #tpu.memory_space<vmem>>, vector<8x324xbf16>,
    %17 = vector.extract_strided_slice %2 {offsets = [0, 37], sizes = [8, 324], strides = [1, 1]} : vector<8x362xbf16> to vector<8x324xbf16>
    %c56 = arith.constant 56 : index
    %c0_10 = arith.constant 0 : index
    %18 = vector.load %arg8[%c56, %c0_10] : memref<72x324xbf16, #tpu.memory_space<vmem>>, vector<8x324xbf16>
    tpu.vector_store %arg8[%c56, %c0_10], %17 {strides = array<i32>} : memref<72x324xbf16, #tpu.memory_space<vmem>>, vector<8x324xbf16>,
    %19 = vector.extract_strided_slice %2 {offsets = [0, 38], sizes = [8, 324], strides = [1, 1]} : vector<8x362xbf16> to vector<8x324xbf16>
    %c64 = arith.constant 64 : index
    %c0_11 = arith.constant 0 : index
    %20 = vector.load %arg8[%c64, %c0_11] : memref<72x324xbf16, #tpu.memory_space<vmem>>, vector<8x324xbf16>
    tpu.vector_store %arg8[%c64, %c0_11], %19 {strides = array<i32>} : memref<72x324xbf16, #tpu.memory_space<vmem>>, vector<8x324xbf16>,
    %c0_12 = arith.constant 0 : index
    %c0_13 = arith.constant 0 : index
    %21 = vector.load %arg3[%c0_12, %c0_13] : memref<8x72xbf16, #tpu.memory_space<vmem>>, vector<8x72xbf16>
    %c0_14 = arith.constant 0 : index
    %c0_15 = arith.constant 0 : index
    %22 = vector.load %arg8[%c0_14, %c0_15] : memref<72x324xbf16, #tpu.memory_space<vmem>>, vector<72x324xbf16>
    %cst = arith.constant dense<0.000000e+00> : vector<8x324xf32>
    %23 = tpu.matmul %21, %22, %cst {dimension_numbers = #tpu.dot_dimension_numbers<[1], [0], [0], [1], [0, 0, 1, 1], [], []>} : vector<8x72xbf16>, vector<72x324xbf16>, vector<8x324xf32> -> vector<8x324xf32>
    %c0_16 = arith.constant 0 : index
    %c0_17 = arith.constant 0 : index
    %24 = vector.load %arg4[%c0_16, %c0_17] : memref<8x1xf32, #tpu.memory_space<vmem>>, vector<8x1xf32>
    %25 = vector.broadcast %24 : vector<8x1xf32> to vector<8x324xf32>
    %26 = arith.addf %23, %25 : vector<8x324xf32>
    %cst_18 = arith.constant 0.000000e+00 : f32
    %27 = vector.broadcast %cst_18 : f32 to vector<8x324xf32>
    %28 = arith.maximumf %26, %27 : vector<8x324xf32>
    %c0_19 = arith.constant 0 : index
    %c0_20 = arith.constant 0 : index
    %29 = vector.load %arg2[%c0_19, %c0_20] : memref<1x324xf32, #tpu.memory_space<vmem>>, vector<1x324xf32>
    %30 = vector.broadcast %29 : vector<1x324xf32> to vector<8x324xf32>
    %31 = arith.mulf %28, %30 : vector<8x324xf32>
    %cst_21 = arith.constant 0.000000e+00 : bf16
    %32 = vector.broadcast %cst_21 : bf16 to vector<8x19xbf16>
    %c0_22 = arith.constant 0 : index
    %c0_23 = arith.constant 0 : index
    %33 = vector.load %arg9[%c0_22, %c0_23] : memref<8x362xbf16, #tpu.memory_space<vmem>>, vector<8x19xbf16>
    tpu.vector_store %arg9[%c0_22, %c0_23], %32 {strides = array<i32>} : memref<8x362xbf16, #tpu.memory_space<vmem>>, vector<8x19xbf16>,
    %c0_24 = arith.constant 0 : index
    %c343 = arith.constant 343 : index
    %34 = vector.load %arg9[%c0_24, %c343] : memref<8x362xbf16, #tpu.memory_space<vmem>>, vector<8x19xbf16>
    tpu.vector_store %arg9[%c0_24, %c343], %32 {strides = array<i32>} : memref<8x362xbf16, #tpu.memory_space<vmem>>, vector<8x19xbf16>,
    %35 = arith.truncf %31 : vector<8x324xf32> to vector<8x324xbf16>
    %c0_25 = arith.constant 0 : index
    %c19 = arith.constant 19 : index
    %36 = vector.load %arg9[%c0_25, %c19] : memref<8x362xbf16, #tpu.memory_space<vmem>>, vector<8x324xbf16>
    tpu.vector_store %arg9[%c0_25, %c19], %35 {strides = array<i32>} : memref<8x362xbf16, #tpu.memory_space<vmem>>, vector<8x324xbf16>,
    %c0_26 = arith.constant 0 : index
    %c0_27 = arith.constant 0 : index
    %37 = vector.load %arg9[%c0_26, %c0_27] : memref<8x362xbf16, #tpu.memory_space<vmem>>, vector<8x324xbf16>
    %c0_28 = arith.constant 0 : index
    %c0_29 = arith.constant 0 : index
    %38 = vector.load %arg8[%c0_28, %c0_29] : memref<72x324xbf16, #tpu.memory_space<vmem>>, vector<8x324xbf16>
    tpu.vector_store %arg8[%c0_28, %c0_29], %37 {strides = array<i32>} : memref<72x324xbf16, #tpu.memory_space<vmem>>, vector<8x324xbf16>,
    %c0_30 = arith.constant 0 : index
    %c1 = arith.constant 1 : index
    %39 = vector.load %arg9[%c0_30, %c1] : memref<8x362xbf16, #tpu.memory_space<vmem>>, vector<8x324xbf16>
    %c8_31 = arith.constant 8 : index
    %c0_32 = arith.constant 0 : index
    %40 = vector.load %arg8[%c8_31, %c0_32] : memref<72x324xbf16, #tpu.memory_space<vmem>>, vector<8x324xbf16>
    tpu.vector_store %arg8[%c8_31, %c0_32], %39 {strides = array<i32>} : memref<72x324xbf16, #tpu.memory_space<vmem>>, vector<8x324xbf16>,
    %c0_33 = arith.constant 0 : index
    %c2 = arith.constant 2 : index
    %41 = vector.load %arg9[%c0_33, %c2] : memref<8x362xbf16, #tpu.memory_space<vmem>>, vector<8x324xbf16>
    %c16_34 = arith.constant 16 : index
    %c0_35 = arith.constant 0 : index
    %42 = vector.load %arg8[%c16_34, %c0_35] : memref<72x324xbf16, #tpu.memory_space<vmem>>, vector<8x324xbf16>
    tpu.vector_store %arg8[%c16_34, %c0_35], %41 {strides = array<i32>} : memref<72x324xbf16, #tpu.memory_space<vmem>>, vector<8x324xbf16>,
    %c0_36 = arith.constant 0 : index
    %c18 = arith.constant 18 : index
    %43 = vector.load %arg9[%c0_36, %c18] : memref<8x362xbf16, #tpu.memory_space<vmem>>, vector<8x324xbf16>
    %c24_37 = arith.constant 24 : index
    %c0_38 = arith.constant 0 : index
    %44 = vector.load %arg8[%c24_37, %c0_38] : memref<72x324xbf16, #tpu.memory_space<vmem>>, vector<8x324xbf16>
    tpu.vector_store %arg8[%c24_37, %c0_38], %43 {strides = array<i32>} : memref<72x324xbf16, #tpu.memory_space<vmem>>, vector<8x324xbf16>,
    %c0_39 = arith.constant 0 : index
    %c19_40 = arith.constant 19 : index
    %45 = vector.load %arg9[%c0_39, %c19_40] : memref<8x362xbf16, #tpu.memory_space<vmem>>, vector<8x324xbf16>
    %c32_41 = arith.constant 32 : index
    %c0_42 = arith.constant 0 : index
    %46 = vector.load %arg8[%c32_41, %c0_42] : memref<72x324xbf16, #tpu.memory_space<vmem>>, vector<8x324xbf16>
    tpu.vector_store %arg8[%c32_41, %c0_42], %45 {strides = array<i32>} : memref<72x324xbf16, #tpu.memory_space<vmem>>, vector<8x324xbf16>,
    %c0_43 = arith.constant 0 : index
    %c20 = arith.constant 20 : index
    %47 = vector.load %arg9[%c0_43, %c20] : memref<8x362xbf16, #tpu.memory_space<vmem>>, vector<8x324xbf16>
    %c40_44 = arith.constant 40 : index
    %c0_45 = arith.constant 0 : index
    %48 = vector.load %arg8[%c40_44, %c0_45] : memref<72x324xbf16, #tpu.memory_space<vmem>>, vector<8x324xbf16>
    tpu.vector_store %arg8[%c40_44, %c0_45], %47 {strides = array<i32>} : memref<72x324xbf16, #tpu.memory_space<vmem>>, vector<8x324xbf16>,
    %c0_46 = arith.constant 0 : index
    %c36 = arith.constant 36 : index
    %49 = vector.load %arg9[%c0_46, %c36] : memref<8x362xbf16, #tpu.memory_space<vmem>>, vector<8x324xbf16>
    %c48_47 = arith.constant 48 : index
    %c0_48 = arith.constant 0 : index
    %50 = vector.load %arg8[%c48_47, %c0_48] : memref<72x324xbf16, #tpu.memory_space<vmem>>, vector<8x324xbf16>
    tpu.vector_store %arg8[%c48_47, %c0_48], %49 {strides = array<i32>} : memref<72x324xbf16, #tpu.memory_space<vmem>>, vector<8x324xbf16>,
    %c0_49 = arith.constant 0 : index
    %c37 = arith.constant 37 : index
    %51 = vector.load %arg9[%c0_49, %c37] : memref<8x362xbf16, #tpu.memory_space<vmem>>, vector<8x324xbf16>
    %c56_50 = arith.constant 56 : index
    %c0_51 = arith.constant 0 : index
    %52 = vector.load %arg8[%c56_50, %c0_51] : memref<72x324xbf16, #tpu.memory_space<vmem>>, vector<8x324xbf16>
    tpu.vector_store %arg8[%c56_50, %c0_51], %51 {strides = array<i32>} : memref<72x324xbf16, #tpu.memory_space<vmem>>, vector<8x324xbf16>,
    %c0_52 = arith.constant 0 : index
    %c38 = arith.constant 38 : index
    %53 = vector.load %arg9[%c0_52, %c38] : memref<8x362xbf16, #tpu.memory_space<vmem>>, vector<8x324xbf16>
    %c64_53 = arith.constant 64 : index
    %c0_54 = arith.constant 0 : index
    %54 = vector.load %arg8[%c64_53, %c0_54] : memref<72x324xbf16, #tpu.memory_space<vmem>>, vector<8x324xbf16>
    tpu.vector_store %arg8[%c64_53, %c0_54], %53 {strides = array<i32>} : memref<72x324xbf16, #tpu.memory_space<vmem>>, vector<8x324xbf16>,
    %c0_55 = arith.constant 0 : index
    %c0_56 = arith.constant 0 : index
    %55 = vector.load %arg5[%c0_55, %c0_56] : memref<8x72xbf16, #tpu.memory_space<vmem>>, vector<8x72xbf16>
    %c0_57 = arith.constant 0 : index
    %c0_58 = arith.constant 0 : index
    %56 = vector.load %arg8[%c0_57, %c0_58] : memref<72x324xbf16, #tpu.memory_space<vmem>>, vector<72x324xbf16>
    %cst_59 = arith.constant dense<0.000000e+00> : vector<8x324xf32>
    %57 = tpu.matmul %55, %56, %cst_59 {dimension_numbers = #tpu.dot_dimension_numbers<[1], [0], [0], [1], [0, 0, 1, 1], [], []>} : vector<8x72xbf16>, vector<72x324xbf16>, vector<8x324xf32> -> vector<8x324xf32>
    %c0_60 = arith.constant 0 : index
    %c0_61 = arith.constant 0 : index
    %58 = vector.load %arg6[%c0_60, %c0_61] : memref<8x1xf32, #tpu.memory_space<vmem>>, vector<8x1xf32>
    %59 = vector.broadcast %58 : vector<8x1xf32> to vector<8x324xf32>
    %60 = arith.addf %57, %59 : vector<8x324xf32>
    %61 = vector.extract_strided_slice %1 {offsets = [0, 19], sizes = [8, 324], strides = [1, 1]} : vector<8x362xf32> to vector<8x324xf32>
    %62 = arith.addf %61, %60 : vector<8x324xf32>
    %c0_62 = arith.constant 0 : index
    %c0_63 = arith.constant 0 : index
    %c0_64 = arith.constant 0 : index
    %63 = vector.load %arg7[%c0_62, %c0_63, %c0_64] : memref<1x8x324xf32, #tpu.memory_space<vmem>>, vector<1x8x324xf32>
    %64 = vector.shape_cast %63 : vector<1x8x324xf32> to vector<8x324xf32>
    %65 = vector.shape_cast %62 : vector<8x324xf32> to vector<1x8x324xf32>
    tpu.vector_store %arg7[%c0_62, %c0_63, %c0_64], %65 {strides = array<i32>} : memref<1x8x324xf32, #tpu.memory_space<vmem>>, vector<1x8x324xf32>,
    return
  }
  func.func @transform_0(%arg0: i32) -> (i32, i32, i32) {
    %c0_i32 = arith.constant 0 : i32
    %c0_i32_0 = arith.constant 0 : i32
    %c0_i32_1 = arith.constant 0 : i32
    return %arg0, %c0_i32, %c0_i32_0 : i32, i32, i32
  }
  func.func @transform_1(%arg0: i32) -> (i32, i32) {
    %c0_i32 = arith.constant 0 : i32
    %c0_i32_0 = arith.constant 0 : i32
    %c0_i32_1 = arith.constant 0 : i32
    return %c0_i32, %c0_i32_0 : i32, i32
  }
  func.func @transform_2(%arg0: i32) -> (i32, i32) {
    %c0_i32 = arith.constant 0 : i32
    %c0_i32_0 = arith.constant 0 : i32
    %c0_i32_1 = arith.constant 0 : i32
    return %c0_i32, %c0_i32_0 : i32, i32
  }
  func.func @transform_3(%arg0: i32) -> (i32, i32) {
    %c0_i32 = arith.constant 0 : i32
    %c0_i32_0 = arith.constant 0 : i32
    %c0_i32_1 = arith.constant 0 : i32
    return %c0_i32, %c0_i32_0 : i32, i32
  }
  func.func @transform_4(%arg0: i32) -> (i32, i32) {
    %c0_i32 = arith.constant 0 : i32
    %c0_i32_0 = arith.constant 0 : i32
    %c0_i32_1 = arith.constant 0 : i32
    return %c0_i32, %c0_i32_0 : i32, i32
  }
  func.func @transform_5(%arg0: i32) -> (i32, i32) {
    %c0_i32 = arith.constant 0 : i32
    %c0_i32_0 = arith.constant 0 : i32
    %c0_i32_1 = arith.constant 0 : i32
    return %c0_i32, %c0_i32_0 : i32, i32
  }
  func.func @transform_6(%arg0: i32) -> (i32, i32, i32) {
    %c0_i32 = arith.constant 0 : i32
    %c0_i32_0 = arith.constant 0 : i32
    %c0_i32_1 = arith.constant 0 : i32
    return %arg0, %c0_i32, %c0_i32_0 : i32, i32, i32
  }
}

</mosaic_0001>

<llo_original>
// kernel: tpu_custom_call.1
$region0: #{tpu_custom_call.1}
  #allocation0 [shape = 'u32[]', space=smem, size = 0x4, offset = 0x4, fixed_abs, tag = 'smem constant byte address 0x4 - core index']
  #allocation1 [shape = 'u32[72,128]{1,0:T(1,128)}', space=vmem, size = 0x9000, scoped, tag = 'internal scratch']
  #allocation2 [shape = 'bf16[72,324]{1,0:T(8,128)(2,1)}', space=vmem, size = 0xd800, scoped, tag = 'scratch operand']
  #allocation3 [shape = 'bf16[8,362]{1,0:T(8,128)(2,1)}', space=vmem, size = 0x1800, scoped, tag = 'scratch operand']
  %s0 = inlined_call_operand.hbm [shape: f32[2,8,362], index: 0, kind: input, shape index: {}]
  %s1 = inlined_call_operand.vmem [shape: f32[1,324], index: 1, kind: input, shape index: {}]
  %s2 = inlined_call_operand.vmem [shape: bf16[8,72], index: 2, kind: input, shape index: {}]
  %s3 = inlined_call_operand.vmem [shape: f32[8,1], index: 3, kind: input, shape index: {}]
  %s4 = inlined_call_operand.vmem [shape: bf16[8,72], index: 4, kind: input, shape index: {}]
  %s5 = inlined_call_operand.vmem [shape: f32[8,1], index: 5, kind: input, shape index: {}]
  %s6 = inlined_call_operand.hbm [shape: f32[2,8,324], index: 6, kind: output, shape index: {}]
  %s7 = sld [smem:[#allocation0]]
  $region61: #{tpu_custom_call.1} parent=0
    _
  %s9 = ssub.s32 1, %s7
  %s10 = scalar_select 0, %s9, %s7
  $region1: #{tpu_custom_call.1} parent=0
    #allocation4 [shape = 'u8[24576]{0}', space=vmem, size = 0x6000, scoped, tag = 'input window, operand 0']
    #allocation5 [shape = 's32[2]{0}', space=sflag, size = 0x8, scoped, tag = 'scoped memory for tpu_custom_call.1']
    #allocation6 [shape = 's32[2]{0}', space=sflag, size = 0x8, scoped, tag = 'scoped memory for tpu_custom_call.1']
    #allocation7 [shape = 'u8[24576]{0}', space=vmem, size = 0x6000, scoped, tag = 'output window, operand 0']
    %11 = vsyncpa [#allocation5], 0
    %s12 = scalar_lea.sflag [#allocation5], 1
    %13 = vsyncpa %s12, 0
    %14 = vsyncpa [#allocation6], 0
    %s15 = scalar_lea.sflag [#allocation6], 1
    %16 = vsyncpa %s15, 0
    loop: start=0, step=1, limit=4
    $region2: #{tpu_custom_call.1} parent=1 // loop_pre_header
      _
    $region3: #{tpu_custom_call.1} parent=1 // loop_header
      %s18 = sphi 0, %s22
      %p19 = scmp.ge.s32.totalorder %s18, 4
      %s28 = sphi 0, %s30
      %s31 = sphi 0, %s28
      %s32 = sphi 0, %s31
      %s48 = sphi 0, %s32
      %s52 = sphi 0, %s52
      %s54 = sphi 0, %s52
      %s55 = sphi 0, %s54
      %s69 = sphi 0, %s55
      %s73 = sphi 0, %s73
      %s75 = sphi 0, %s73
      %s76 = sphi 0, %s75
      %s90 = sphi 0, %s76
      %s94 = sphi 0, %s94
      %s96 = sphi 0, %s94
      %s97 = sphi 0, %s96
      %s111 = sphi 0, %s97
      %s115 = sphi 0, %s115
      %s117 = sphi 0, %s115
      %s118 = sphi 0, %s117
      %s132 = sphi 0, %s118
      %s136 = sphi 0, %s136
      %s138 = sphi 0, %s136
      %s139 = sphi 0, %s138
      %s153 = sphi 0, %s139
      %s159 = sphi 0, %s161
      %s162 = sphi 0, %s159
      %s163 = sphi 0, %s162
      %s179 = sphi 0, %s163
    $region4: #{tpu_custom_call.1} parent=1 // loop_header_branch
      %21 = sbr.rel (%p19) target = $region8
    $region5: #{tpu_custom_call.1} parent=1 // loop_body
      %s23 = ssub.s32 %s18, 1
      %s24 = ssub.s32 %s18, 2
      %s25 = sadd.s32 %s18, 1
      %s26 = ssub.s32 %s18, %s25
      %p27 = scmp.eq.s32.totalorder %s26, 0
      %s29 = sadd.s32 %s28, 1
      %s30 = scalar_select %p27, %s28, %s29
      %p33 = pneg %p27
      %p34 = scmp.eq.s32.totalorder %s18, 1
      %p35 = por %p33, %p34
      %p36 = scmp.ne.s32.totalorder %s28, %s31
      %p37 = scmp.eq.s32.totalorder %s18, 0
      %p38 = por %p36, %p37
      %p39 = scmp.ne.s32.totalorder %s28, %s31
      %p40 = scmp.eq.s32.totalorder %s23, 1
      %p41 = por %p39, %p40
      %p42 = scmp.ne.s32.totalorder %s31, %s32
      %p43 = scmp.eq.s32.totalorder %s23, 0
      %p44 = por %p42, %p43
      %p45 = scmp.ne.s32.totalorder %s31, %s32
      %p46 = scmp.eq.s32.totalorder %s24, 1
      %p47 = por %p45, %p46
      %p49 = scmp.ne.s32.totalorder %s32, %s48
      %p50 = scmp.eq.s32.totalorder %s24, 0
      %p51 = por %p49, %p50
      %s53 = sadd.s32 %s52, 1
      %p56 = scmp.eq.s32.totalorder %s18, 1
      %p57 = scmp.ne.s32.totalorder %s52, %s54
      %p58 = scmp.eq.s32.totalorder %s18, 0
      %p59 = por %p57, %p58
      %p60 = scmp.ne.s32.totalorder %s52, %s54
      %p61 = scmp.eq.s32.totalorder %s23, 1
      %p62 = por %p60, %p61
      %p63 = scmp.ne.s32.totalorder %s54, %s55
      %p64 = scmp.eq.s32.totalorder %s23, 0
      %p65 = por %p63, %p64
      %p66 = scmp.ne.s32.totalorder %s54, %s55
      %p67 = scmp.eq.s32.totalorder %s24, 1
      %p68 = por %p66, %p67
      %p70 = scmp.ne.s32.totalorder %s55, %s69
      %p71 = scmp.eq.s32.totalorder %s24, 0
      %p72 = por %p70, %p71
      %s74 = sadd.s32 %s73, 1
      %p77 = scmp.eq.s32.totalorder %s18, 1
      %p78 = scmp.ne.s32.totalorder %s73, %s75
      %p79 = scmp.eq.s32.totalorder %s18, 0
      %p80 = por %p78, %p79
      %p81 = scmp.ne.s32.totalorder %s73, %s75
      %p82 = scmp.eq.s32.totalorder %s23, 1
      %p83 = por %p81, %p82
      %p84 = scmp.ne.s32.totalorder %s75, %s76
      %p85 = scmp.eq.s32.totalorder %s23, 0
      %p86 = por %p84, %p85
      %p87 = scmp.ne.s32.totalorder %s75, %s76
      %p88 = scmp.eq.s32.totalorder %s24, 1
      %p89 = por %p87, %p88
      %p91 = scmp.ne.s32.totalorder %s76, %s90
      %p92 = scmp.eq.s32.totalorder %s24, 0
      %p93 = por %p91, %p92
      %s95 = sadd.s32 %s94, 1
      %p98 = scmp.eq.s32.totalorder %s18, 1
      %p99 = scmp.ne.s32.totalorder %s94, %s96
      %p100 = scmp.eq.s32.totalorder %s18, 0
      %p101 = por %p99, %p100
      %p102 = scmp.ne.s32.totalorder %s94, %s96
      %p103 = scmp.eq.s32.totalorder %s23, 1
      %p104 = por %p102, %p103
      %p105 = scmp.ne.s32.totalorder %s96, %s97
      %p106 = scmp.eq.s32.totalorder %s23, 0
      %p107 = por %p105, %p106
      %p108 = scmp.ne.s32.totalorder %s96, %s97
      %p109 = scmp.eq.s32.totalorder %s24, 1
      %p110 = por %p108, %p109
      %p112 = scmp.ne.s32.totalorder %s97, %s111
      %p113 = scmp.eq.s32.totalorder %s24, 0
      %p114 = por %p112, %p113
      %s116 = sadd.s32 %s115, 1
      %p119 = scmp.eq.s32.totalorder %s18, 1
      %p120 = scmp.ne.s32.totalorder %s115, %s117
      %p121 = scmp.eq.s32.totalorder %s18, 0
      %p122 = por %p120, %p121
      %p123 = scmp.ne.s32.totalorder %s115, %s117
      %p124 = scmp.eq.s32.totalorder %s23, 1
      %p125 = por %p123, %p124
      %p126 = scmp.ne.s32.totalorder %s117, %s118
      %p127 = scmp.eq.s32.totalorder %s23, 0
      %p128 = por %p126, %p127
      %p129 = scmp.ne.s32.totalorder %s117, %s118
      %p130 = scmp.eq.s32.totalorder %s24, 1
      %p131 = por %p129, %p130
      %p133 = scmp.ne.s32.totalorder %s118, %s132
      %p134 = scmp.eq.s32.totalorder %s24, 0
      %p135 = por %p133, %p134
      %s137 = sadd.s32 %s136, 1
      %p140 = scmp.eq.s32.totalorder %s18, 1
      %p141 = scmp.ne.s32.totalorder %s136, %s138
      %p142 = scmp.eq.s32.totalorder %s18, 0
      %p143 = por %p141, %p142
      %p144 = scmp.ne.s32.totalorder %s136, %s138
      %p145 = scmp.eq.s32.totalorder %s23, 1
      %p146 = por %p144, %p145
      %p147 = scmp.ne.s32.totalorder %s138, %s139
      %p148 = scmp.eq.s32.totalorder %s23, 0
      %p149 = por %p147, %p148
      %p150 = scmp.ne.s32.totalorder %s138, %s139
      %p151 = scmp.eq.s32.totalorder %s24, 1
      %p152 = por %p150, %p151
      %p154 = scmp.ne.s32.totalorder %s139, %s153
      %p155 = scmp.eq.s32.totalorder %s24, 0
      %p156 = por %p154, %p155
      %s157 = ssub.s32 %s18, %s25
      %p158 = scmp.eq.s32.totalorder %s157, 0
      %s160 = sadd.s32 %s159, 1
      %s161 = scalar_select %p158, %s159, %s160
      %p164 = pneg %p158
      %p165 = scmp.eq.s32.totalorder %s18, 1
      %p166 = por %p164, %p165
      %p167 = scmp.ne.s32.totalorder %s159, %s162
      %p168 = scmp.eq.s32.totalorder %s18, 0
      %p169 = por %p167, %p168
      %p170 = scmp.ne.s32.totalorder %s159, %s162
      %p171 = scmp.eq.s32.totalorder %s23, 1
      %p172 = por %p170, %p171
      %p173 = scmp.ne.s32.totalorder %s162, %s163
      %p174 = scmp.eq.s32.totalorder %s23, 0
      %p175 = por %p173, %p174
      %p176 = scmp.ne.s32.totalorder %s162, %s163
      %p177 = scmp.eq.s32.totalorder %s24, 1
      %p178 = por %p176, %p177
      %p180 = scmp.ne.s32.totalorder %s163, %s179
      %p181 = scmp.eq.s32.totalorder %s24, 0
      %p182 = por %p180, %p181
      %p183 = scmp.le.s32.totalorder 1, %s18
      %p184 = scmp.lt.s32.totalorder %s18, 3
      %p185 = pnand %p183, %p184
      %p186 = pneg %p185
      // Predicated region
      $region9: #{tpu_custom_call.1} parent=5 // pred_check
        _
      $region10: #{tpu_custom_call.1} parent=5 // pred_check_branch
        %188 = sbr.rel (%p185) target = $region12
      $region11: #{tpu_custom_call.1} parent=5 // pred_region
        %s189 = ssub.s32 %s18, 1
        // Predicated region
        $region13: #{tpu_custom_call.1} parent=11 // pred_check
          %p190 = pneg %p65
        $region14: #{tpu_custom_call.1} parent=11 // pred_check_branch
          %192 = sbr.rel (%p190) target = $region16
        $region15: #{tpu_custom_call.1} parent=11 // pred_region
          _
        $region16: #{tpu_custom_call.1} parent=11 // pred_fallthru
          _
        // Predicated region
        $region17: #{tpu_custom_call.1} parent=11 // pred_check
          %p193 = pneg %p86
        $region18: #{tpu_custom_call.1} parent=11 // pred_check_branch
          %195 = sbr.rel (%p193) target = $region20
        $region19: #{tpu_custom_call.1} parent=11 // pred_region
          _
        $region20: #{tpu_custom_call.1} parent=11 // pred_fallthru
          _
        // Predicated region
        $region21: #{tpu_custom_call.1} parent=11 // pred_check
          %p196 = pneg %p107
        $region22: #{tpu_custom_call.1} parent=11 // pred_check_branch
          %198 = sbr.rel (%p196) target = $region24
        $region23: #{tpu_custom_call.1} parent=11 // pred_region
          _
        $region24: #{tpu_custom_call.1} parent=11 // pred_fallthru
          _
        // Predicated region
        $region25: #{tpu_custom_call.1} parent=11 // pred_check
          %p199 = pneg %p128
        $region26: #{tpu_custom_call.1} parent=11 // pred_check_branch
          %201 = sbr.rel (%p199) target = $region28
        $region27: #{tpu_custom_call.1} parent=11 // pred_region
          _
        $region28: #{tpu_custom_call.1} parent=11 // pred_fallthru
          _
        // Predicated region
        $region29: #{tpu_custom_call.1} parent=11 // pred_check
          %p202 = pneg %p149
        $region30: #{tpu_custom_call.1} parent=11 // pred_check_branch
          %204 = sbr.rel (%p202) target = $region32
        $region31: #{tpu_custom_call.1} parent=11 // pred_region
          _
        $region32: #{tpu_custom_call.1} parent=11 // pred_fallthru
          _
      $region12: #{tpu_custom_call.1} parent=5 // pred_fallthru
        _
      %p205 = scmp.lt.s32.totalorder %s18, 2
      // Predicated region
      $region33: #{tpu_custom_call.1} parent=5 // pred_check
        %p206 = pneg %p205
      $region34: #{tpu_custom_call.1} parent=5 // pred_check_branch
        %208 = sbr.rel (%p206) target = $region36
      $region35: #{tpu_custom_call.1} parent=5 // pred_region
        // Predicated region
        $region37: #{tpu_custom_call.1} parent=35 // pred_check
          %p209 = pneg %p38
        $region38: #{tpu_custom_call.1} parent=35 // pred_check_branch
          %211 = sbr.rel (%p209) target = $region40
        $region39: #{tpu_custom_call.1} parent=35 // pred_region
          %s212 = sand.u32 %s28, 1
          %s213 = scalar_lea.sflag [#allocation5], %s212
          %s214 = sand.u32 %s28, 1
          %s215 = smul.addr %s214, 24
          %s216 = scalar_lea.vmem [#allocation4], %s215
          %218 = vsyncadd %s213, 0
          %s219 = smul.addr %s18, 3
          %s220 = smul.addr %s219, 8
          %s221 = scalar_lea.hbm %s0, %s220
          %s223 = sshll.u32 %s221, 4
          %s224 = int_to_ptr.hbm [resolvable:$true] %s223
          %s225 = sshll.u32 %s216, 4
          %s226 = int_to_ptr.vmem [resolvable:$true] %s225
          %228 = dma.hbm_to_vmem [thread:$0]  %s224, 384, %s226, %s213
        $region40: #{tpu_custom_call.1} parent=35 // pred_fallthru
          _
      $region36: #{tpu_custom_call.1} parent=5 // pred_fallthru
        _
      %p229 = scmp.le.s32.totalorder 1, %s18
      %p230 = scmp.lt.s32.totalorder %s18, 3
      %p231 = pnand %p229, %p230
      %p232 = pneg %p231
      // Predicated region
      $region41: #{tpu_custom_call.1} parent=5 // pred_check
        _
      $region42: #{tpu_custom_call.1} parent=5 // pred_check_branch
        %234 = sbr.rel (%p231) target = $region44
      $region43: #{tpu_custom_call.1} parent=5 // pred_region
        %s235 = ssub.s32 %s18, 1
        %s236 = sand.u32 %s31, 1
        %s237 = scalar_lea.sflag [#allocation5], %s236
        %s238 = sand.u32 %s31, 1
        %s239 = smul.addr %s238, 24
        %s240 = scalar_lea.vmem [#allocation4], %s239
        // Predicated region
        $region45: #{tpu_custom_call.1} parent=43 // pred_check
          %p241 = pneg %p44
        $region46: #{tpu_custom_call.1} parent=43 // pred_check_branch
          %243 = sbr.rel (%p241) target = $region48
        $region47: #{tpu_custom_call.1} parent=43 // pred_region
          %245 = dma.done %s237, 384
        $region48: #{tpu_custom_call.1} parent=43 // pred_fallthru
          _
        %s246 = sand.u32 %s31, 1
        %s247 = scalar_lea.sflag [#allocation5], %s246
        %s248 = sand.u32 %s31, 1
        %s249 = smul.addr %s248, 24
        %s250 = scalar_lea.vmem [#allocation4], %s249
        %p251 = pneg %p44
        %p252 = pneg %p41
        %p253 = pneg %p65
        %p254 = pneg %p62
        %p255 = pneg %p86
        %p256 = pneg %p83
        %p257 = pneg %p107
        %p258 = pneg %p104
        %p259 = pneg %p128
        %p260 = pneg %p125
        %p261 = pneg %p149
        %p262 = pneg %p146
        %p263 = pneg %p175
        %p264 = pneg %p172
        %s265 = sand.u32 %s162, 1
        %s266 = scalar_lea.sflag [#allocation6], %s265
        %s267 = sand.u32 %s162, 1
        %s268 = smul.addr %s267, 24
        %s269 = scalar_lea.vmem [#allocation7], %s268
        %v271 = vld [vmem:[%s240] sm:$0xff]
        %v272 = vld [vmem:[%s240 + $0x8] sm:$0xff]
        %v273 = vld [vmem:[%s240 + $0x10] sm:$0xff]
        %v274 = vpack.c.bf16 %v272, %v271
        %v275 = vpack.c.bf16 %v273, %v273
        %276 = vst [vmem:[#allocation2] sm:$0xff] %v274
        %vm277 = vcmask 551936
        %278 = vst.msk [vmem:[#allocation2 + $0x8] sm:$0xf] %vm277, %v275
        %281 = vrot.lane.b32.xlu0 %v274, 127
        %v282 = vpop.permute.xlu0 %281
        %283 = vrot.lane.b32.xlu0 %v275, 127
        %v284 = vpop.permute.xlu0 %283
        %v285 = vrot.slane %v282, 4
        %v286 = vrot.slane %v284, 4
        %vm287 = vcmask 1043456
        %v288 = vsel %vm287, %v285, %v286
        %vm289 = vcmask 1039360
        %v290 = vsel %vm289, %v282, %v288
        %293 = vst [vmem:[#allocation2 + $0xc] sm:$0xff] %v290
        %294 = vst.msk [vmem:[#allocation2 + $0x14] sm:$0xf] %vm277, %v284
        %295 = vrot.lane.b32.xlu0 %v274, 126
        %v296 = vpop.permute.xlu0 %295
        %297 = vrot.lane.b32.xlu0 %v275, 126
        %v298 = vpop.permute.xlu0 %297
        %v299 = vrot.slane %v296, 4
        %v300 = vrot.slane %v298, 4
        %v301 = vsel %vm287, %v299, %v300
        %vm302 = vcmask 1031168
        %v303 = vsel %vm302, %v296, %v301
        %306 = vst [vmem:[#allocation2 + $0x18] sm:$0xff] %v303
        %307 = vst.msk [vmem:[#allocation2 + $0x20] sm:$0xf] %vm277, %v298
        %308 = vrot.lane.b32.xlu0 %v274, 110
        %v309 = vpop.permute.xlu0 %308
        %310 = vrot.lane.b32.xlu0 %v275, 110
        %v311 = vpop.permute.xlu0 %310
        %v312 = vrot.slane %v309, 4
        %v313 = vrot.slane %v311, 4
        %v314 = vsel %vm287, %v312, %v313
        %vm315 = vcmask 900096
        %v316 = vsel %vm315, %v309, %v314
        %319 = vst [vmem:[#allocation2 + $0x24] sm:$0xff] %v316
        %320 = vst.msk [vmem:[#allocation2 + $0x2c] sm:$0xf] %vm277, %v311
        %321 = vrot.lane.b32.xlu0 %v274, 109
        %v322 = vpop.permute.xlu0 %321
        %323 = vrot.lane.b32.xlu0 %v275, 109
        %v324 = vpop.permute.xlu0 %323
        %v325 = vrot.slane %v322, 4
        %v326 = vrot.slane %v324, 4
        %v327 = vsel %vm287, %v325, %v326
        %vm328 = vcmask 891904
        %v329 = vsel %vm328, %v322, %v327
        %332 = vst [vmem:[#allocation2 + $0x30] sm:$0xff] %v329
        %333 = vst.msk [vmem:[#allocation2 + $0x38] sm:$0xf] %vm277, %v324
        %334 = vrot.lane.b32.xlu0 %v274, 108
        %v335 = vpop.permute.xlu0 %334
        %336 = vrot.lane.b32.xlu0 %v275, 108
        %v337 = vpop.permute.xlu0 %336
        %v338 = vrot.slane %v335, 4
        %v339 = vrot.slane %v337, 4
        %v340 = vsel %vm287, %v338, %v339
        %vm341 = vcmask 883712
        %v342 = vsel %vm341, %v335, %v340
        %345 = vst [vmem:[#allocation2 + $0x3c] sm:$0xff] %v342
        %346 = vst.msk [vmem:[#allocation2 + $0x44] sm:$0xf] %vm277, %v337
        %347 = vrot.lane.b32.xlu0 %v274, 92
        %v348 = vpop.permute.xlu0 %347
        %349 = vrot.lane.b32.xlu0 %v275, 92
        %v350 = vpop.permute.xlu0 %349
        %v351 = vrot.slane %v348, 4
        %v352 = vrot.slane %v350, 4
        %v353 = vsel %vm287, %v351, %v352
        %vm354 = vcmask 752640
        %v355 = vsel %vm354, %v348, %v353
        %358 = vst [vmem:[#allocation2 + $0x48] sm:$0xff] %v355
        %359 = vst.msk [vmem:[#allocation2 + $0x50] sm:$0xf] %vm277, %v350
        %360 = vrot.lane.b32.xlu0 %v274, 91
        %v361 = vpop.permute.xlu0 %360
        %362 = vrot.lane.b32.xlu0 %v275, 91
        %v363 = vpop.permute.xlu0 %362
        %v364 = vrot.slane %v361, 4
        %v365 = vrot.slane %v363, 4
        %v366 = vsel %vm287, %v364, %v365
        %vm367 = vcmask 744448
        %v368 = vsel %vm367, %v361, %v366
        %371 = vst [vmem:[#allocation2 + $0x54] sm:$0xff] %v368
        %372 = vst.msk [vmem:[#allocation2 + $0x5c] sm:$0xf] %vm277, %v363
        %373 = vrot.lane.b32.xlu0 %v274, 90
        %v374 = vpop.permute.xlu0 %373
        %375 = vrot.lane.b32.xlu0 %v275, 90
        %v376 = vpop.permute.xlu0 %375
        %v377 = vrot.slane %v374, 4
        %v378 = vrot.slane %v376, 4
        %v379 = vsel %vm287, %v377, %v378
        %vm380 = vcmask 736256
        %v381 = vsel %vm380, %v374, %v379
        %384 = vst [vmem:[#allocation2 + $0x60] sm:$0xff] %v381
        %385 = vst.msk [vmem:[#allocation2 + $0x68] sm:$0xf] %vm277, %v376
        %v386 = vld [vmem:[%s2] sm:$0xf]
        %v387 = vld [vmem:[#allocation2] sm:$0xff]
        %v388 = vld [vmem:[#allocation2 + $0x8] sm:$0xf]
        %v389 = vld [vmem:[#allocation2 + $0xc] sm:$0xff]
        %v390 = vld [vmem:[#allocation2 + $0x14] sm:$0xf]
        %v391 = vld [vmem:[#allocation2 + $0x18] sm:$0xff]
        %v392 = vld [vmem:[#allocation2 + $0x20] sm:$0xf]
        %v393 = vld [vmem:[#allocation2 + $0x24] sm:$0xff]
        %v394 = vld [vmem:[#allocation2 + $0x2c] sm:$0xf]
        %v395 = vld [vmem:[#allocation2 + $0x30] sm:$0xff]
        %v396 = vld [vmem:[#allocation2 + $0x38] sm:$0xf]
        %v397 = vld [vmem:[#allocation2 + $0x3c] sm:$0xff]
        %v398 = vld [vmem:[#allocation2 + $0x44] sm:$0xf]
        %v399 = vld [vmem:[#allocation2 + $0x48] sm:$0xff]
        %v400 = vld [vmem:[#allocation2 + $0x50] sm:$0xf]
        %v401 = vld [vmem:[#allocation2 + $0x54] sm:$0xff]
        %v402 = vld [vmem:[#allocation2 + $0x5c] sm:$0xf]
        %v403 = vld [vmem:[#allocation2 + $0x60] sm:$0xff]
        %v404 = vld [vmem:[#allocation2 + $0x68] sm:$0xf]
        %v405 = vld [vmem:[%s3] sm:$0xff]
        %407 = vset.pattern.permute.xlu0 0
        %408 = vperm.xlu0 %407, %v405
        %v409 = vpop.permute.xlu0 %408
        %v429 = vunpack.c.l.b16 %v387
        %v430 = vunpack.c.h.b16 %v387
        %v431 = vunpack.c.l.b16 %v388
        %v432 = vunpack.c.l.b16 %v389
        %v433 = vunpack.c.h.b16 %v389
        %v434 = vunpack.c.l.b16 %v390
        %v435 = vunpack.c.l.b16 %v391
        %v436 = vunpack.c.h.b16 %v391
        %v437 = vunpack.c.l.b16 %v392
        %v438 = vunpack.c.l.b16 %v393
        %v439 = vunpack.c.h.b16 %v393
        %v440 = vunpack.c.l.b16 %v394
        %v441 = vunpack.c.l.b16 %v395
        %v442 = vunpack.c.h.b16 %v395
        %v443 = vunpack.c.l.b16 %v396
        %v444 = vunpack.c.l.b16 %v397
        %v445 = vunpack.c.h.b16 %v397
        %v446 = vunpack.c.l.b16 %v398
        %v447 = vunpack.c.l.b16 %v399
        %v448 = vunpack.c.h.b16 %v399
        %v449 = vunpack.c.l.b16 %v400
        %v450 = vunpack.c.l.b16 %v401
        %v451 = vunpack.c.h.b16 %v401
        %v452 = vunpack.c.l.b16 %v402
        %v453 = vunpack.c.l.b16 %v403
        %v454 = vunpack.c.h.b16 %v403
        %v455 = vunpack.c.l.b16 %v404
        %v456 = vpack.c.b16 %v432, %v429
        %v457 = vpack.c.b16 %v433, %v430
        %v458 = vpack.c.b16 %v434, %v431
        %v459 = vpack.c.b16 %v438, %v435
        %v460 = vpack.c.b16 %v439, %v436
        %v461 = vpack.c.b16 %v440, %v437
        %v462 = vpack.c.b16 %v444, %v441
        %v463 = vpack.c.b16 %v445, %v442
        %v464 = vpack.c.b16 %v446, %v443
        %v465 = vpack.c.b16 %v450, %v447
        %v466 = vpack.c.b16 %v451, %v448
        %v467 = vpack.c.b16 %v452, %v449
        %v468 = vpack.c.b16 %v453, %v453
        %v469 = vpack.c.b16 %v454, %v454
        %v470 = vpack.c.b16 %v455, %v455
        %vm483 = vcmask 588800
        %v485 = vsel %vm483, %v386, 0
        %vm487 = vcmask 1043456
        %v489 = vsel %vm487, %v468, 0
        %v492 = vsel %vm487, %v469, 0
        %v495 = vsel %vm487, %v470, 0
        %497 = vmatpush.bf16.msra.mxu0 0
        %498 = vmatpush.bf16.msra.mxu0 0
        %499 = vmatpush.bf16.msra.mxu0 0
        %500 = vmatpush.bf16.msra.mxu0 %v489
        %501 = vmatpush.bf16.msra.mxu0 %v465
        %502 = vmatpush.bf16.msra.mxu0 %v462
        %503 = vmatpush.bf16.msra.mxu0 %v459
        %504 = vmatpush.bf16.msra.mxu0 %v456
        %505 = vmatmul.bf16.gmra.mxu0 %v485
        %v506 = vpop.f32.mrf.mxu0
        %v507 = vadd.f32 %v409, %v506
        %v508 = vpop.f32.mrf.mxu0
        %509 = vdwg.mxu0
        %510 = vmatpush.bf16.msra.mxu0 0
        %511 = vmatpush.bf16.msra.mxu0 0
        %512 = vmatpush.bf16.msra.mxu0 0
        %513 = vmatpush.bf16.msra.mxu0 %v492
        %514 = vmatpush.bf16.msra.mxu0 %v466
        %515 = vmatpush.bf16.msra.mxu0 %v463
        %516 = vmatpush.bf16.msra.mxu0 %v460
        %517 = vmatpush.bf16.msra.mxu0 %v457
        %518 = vmatmul.bf16.gmra.mxu0 %v485
        %v519 = vpop.f32.mrf.mxu0
        %v520 = vadd.f32 %v409, %v519
        %v521 = vpop.f32.mrf.mxu0
        %522 = vdwg.mxu0
        %523 = vmatpush.bf16.msra.mxu0 0
        %524 = vmatpush.bf16.msra.mxu0 0
        %525 = vmatpush.bf16.msra.mxu0 0
        %526 = vmatpush.bf16.msra.mxu0 %v495
        %527 = vmatpush.bf16.msra.mxu0 %v467
        %528 = vmatpush.bf16.msra.mxu0 %v464
        %529 = vmatpush.bf16.msra.mxu0 %v461
        %530 = vmatpush.bf16.msra.mxu0 %v458
        %531 = vmatmul.bf16.gmra.mxu0 %v485
        %v532 = vpop.f32.mrf.mxu0
        %v533 = vadd.f32 %v409, %v532
        %v534 = vpop.f32.mrf.mxu0
        %535 = vdwg.mxu0
        %v536 = vmax.f32 %v507, 0.0
        %v537 = vmax.f32 %v520, 0.0
        %v538 = vmax.f32 %v533, 0.0
        %v539 = vld [vmem:[%s1] sm:$0x7]
        %v541 = vperm.slane %v539, 0
        %v542 = vperm.slane %v539, 1
        %v543 = vperm.slane %v539, 2
        %v547 = vmul.f32 %v536, %v541
        %v548 = vmul.f32 %v537, %v542
        %v549 = vmul.f32 %v538, %v543
        %vm550 = vcmask 150528
        %551 = vst.msk [vmem:[#allocation3] sm:$0xf] %vm550, 0
        %vm552 = vcmask 863928
        %553 = vst.msk [vmem:[#allocation3 + $0x8] sm:$0xf] %vm552, 0
        %v554 = vpack.c.bf16 %v548, %v547
        %v555 = vpack.c.bf16 %v549, %v549
        %558 = vrot.lane.b32.xlu0 %v554, 19
        %v559 = vpop.permute.xlu0 %558
        %560 = vrot.lane.b32.xlu0 %v555, 19
        %v561 = vpop.permute.xlu0 %560
        %v562 = vrot.slane %v559, 4
        %vm563 = vcmask 154624
        %v564 = vsel %vm563, %v562, %v559
        %v565 = vsel %vm563, %v562, %v561
        %vm568 = vcmask 1043608
        %vm569 = vcmask 1047556
        %vm570 = vmor %vm569, %vm568
        %571 = vst.msk [vmem:[#allocation3] sm:$0xff] %vm570, %v564
        %vm572 = vcmask 707584
        %573 = vst.msk [vmem:[#allocation3 + $0x8] sm:$0xf] %vm572, %v565
        %v574 = vld [vmem:[#allocation3] sm:$0xff]
        %v575 = vld [vmem:[#allocation3 + $0x8] sm:$0xf]
        %576 = vst [vmem:[#allocation2] sm:$0xff] %v574
        %577 = vst.msk [vmem:[#allocation2 + $0x8] sm:$0xf] %vm277, %v575
        %v578 = vld [vmem:[#allocation3] sm:$0xff]
        %v579 = vld [vmem:[#allocation3 + $0x8] sm:$0xf]
        %582 = vrot.lane.b32.xlu0 %v578, 127
        %v583 = vpop.permute.xlu0 %582
        %584 = vrot.lane.b32.xlu0 %v579, 127
        %v585 = vpop.permute.xlu0 %584
        %v586 = vrot.slane %v583, 4
        %v587 = vrot.slane %v585, 4
        %v588 = vsel %vm287, %v586, %v587
        %v589 = vsel %vm289, %v583, %v588
        %592 = vst [vmem:[#allocation2 + $0xc] sm:$0xff] %v589
        %593 = vst.msk [vmem:[#allocation2 + $0x14] sm:$0xf] %vm277, %v585
        %v594 = vld [vmem:[#allocation3] sm:$0xff]
        %v595 = vld [vmem:[#allocation3 + $0x8] sm:$0xf]
        %598 = vrot.lane.b32.xlu0 %v594, 126
        %v599 = vpop.permute.xlu0 %598
        %600 = vrot.lane.b32.xlu0 %v595, 126
        %v601 = vpop.permute.xlu0 %600
        %v602 = vrot.slane %v599, 4
        %v603 = vrot.slane %v601, 4
        %v604 = vsel %vm287, %v602, %v603
        %v605 = vsel %vm302, %v599, %v604
        %608 = vst [vmem:[#allocation2 + $0x18] sm:$0xff] %v605
        %609 = vst.msk [vmem:[#allocation2 + $0x20] sm:$0xf] %vm277, %v601
        %v610 = vld [vmem:[#allocation3] sm:$0xff]
        %v611 = vld [vmem:[#allocation3 + $0x8] sm:$0xf]
        %614 = vrot.lane.b32.xlu0 %v610, 110
        %v615 = vpop.permute.xlu0 %614
        %616 = vrot.lane.b32.xlu0 %v611, 110
        %v617 = vpop.permute.xlu0 %616
        %v618 = vrot.slane %v615, 4
        %v619 = vrot.slane %v617, 4
        %v620 = vsel %vm287, %v618, %v619
        %v621 = vsel %vm315, %v615, %v620
        %624 = vst [vmem:[#allocation2 + $0x24] sm:$0xff] %v621
        %625 = vst.msk [vmem:[#allocation2 + $0x2c] sm:$0xf] %vm277, %v617
        %v626 = vld [vmem:[#allocation3] sm:$0xff]
        %v627 = vld [vmem:[#allocation3 + $0x8] sm:$0xf]
        %630 = vrot.lane.b32.xlu0 %v626, 109
        %v631 = vpop.permute.xlu0 %630
        %632 = vrot.lane.b32.xlu0 %v627, 109
        %v633 = vpop.permute.xlu0 %632
        %v634 = vrot.slane %v631, 4
        %v635 = vrot.slane %v633, 4
        %v636 = vsel %vm287, %v634, %v635
        %v637 = vsel %vm328, %v631, %v636
        %640 = vst [vmem:[#allocation2 + $0x30] sm:$0xff] %v637
        %641 = vst.msk [vmem:[#allocation2 + $0x38] sm:$0xf] %vm277, %v633
        %v642 = vld [vmem:[#allocation3] sm:$0xff]
        %v643 = vld [vmem:[#allocation3 + $0x8] sm:$0xf]
        %646 = vrot.lane.b32.xlu0 %v642, 108
        %v647 = vpop.permute.xlu0 %646
        %648 = vrot.lane.b32.xlu0 %v643, 108
        %v649 = vpop.permute.xlu0 %648
        %v650 = vrot.slane %v647, 4
        %v651 = vrot.slane %v649, 4
        %v652 = vsel %vm287, %v650, %v651
        %v653 = vsel %vm341, %v647, %v652
        %656 = vst [vmem:[#allocation2 + $0x3c] sm:$0xff] %v653
        %657 = vst.msk [vmem:[#allocation2 + $0x44] sm:$0xf] %vm277, %v649
        %v658 = vld [vmem:[#allocation3] sm:$0xff]
        %v659 = vld [vmem:[#allocation3 + $0x8] sm:$0xf]
        %662 = vrot.lane.b32.xlu0 %v658, 92
        %v663 = vpop.permute.xlu0 %662
        %664 = vrot.lane.b32.xlu0 %v659, 92
        %v665 = vpop.permute.xlu0 %664
        %v666 = vrot.slane %v663, 4
        %v667 = vrot.slane %v665, 4
        %v668 = vsel %vm287, %v666, %v667
        %v669 = vsel %vm354, %v663, %v668
        %672 = vst [vmem:[#allocation2 + $0x48] sm:$0xff] %v669
        %673 = vst.msk [vmem:[#allocation2 + $0x50] sm:$0xf] %vm277, %v665
        %v674 = vld [vmem:[#allocation3] sm:$0xff]
        %v675 = vld [vmem:[#allocation3 + $0x8] sm:$0xf]
        %678 = vrot.lane.b32.xlu0 %v674, 91
        %v679 = vpop.permute.xlu0 %678
        %680 = vrot.lane.b32.xlu0 %v675, 91
        %v681 = vpop.permute.xlu0 %680
        %v682 = vrot.slane %v679, 4
        %v683 = vrot.slane %v681, 4
        %v684 = vsel %vm287, %v682, %v683
        %v685 = vsel %vm367, %v679, %v684
        %688 = vst [vmem:[#allocation2 + $0x54] sm:$0xff] %v685
        %689 = vst.msk [vmem:[#allocation2 + $0x5c] sm:$0xf] %vm277, %v681
        %v690 = vld [vmem:[#allocation3] sm:$0xff]
        %v691 = vld [vmem:[#allocation3 + $0x8] sm:$0xf]
        %694 = vrot.lane.b32.xlu0 %v690, 90
        %v695 = vpop.permute.xlu0 %694
        %696 = vrot.lane.b32.xlu0 %v691, 90
        %v697 = vpop.permute.xlu0 %696
        %v698 = vrot.slane %v695, 4
        %v699 = vrot.slane %v697, 4
        %v700 = vsel %vm287, %v698, %v699
        %v701 = vsel %vm380, %v695, %v700
        %704 = vst [vmem:[#allocation2 + $0x60] sm:$0xff] %v701
        %705 = vst.msk [vmem:[#allocation2 + $0x68] sm:$0xf] %vm277, %v697
        %v706 = vld [vmem:[%s4] sm:$0xf]
        %v707 = vld [vmem:[#allocation2] sm:$0xff]
        %v708 = vld [vmem:[#allocation2 + $0x8] sm:$0xf]
        %v709 = vld [vmem:[#allocation2 + $0xc] sm:$0xff]
        %v710 = vld [vmem:[#allocation2 + $0x14] sm:$0xf]
        %v711 = vld [vmem:[#allocation2 + $0x18] sm:$0xff]
        %v712 = vld [vmem:[#allocation2 + $0x20] sm:$0xf]
        %v713 = vld [vmem:[#allocation2 + $0x24] sm:$0xff]
        %v714 = vld [vmem:[#allocation2 + $0x2c] sm:$0xf]
        %v715 = vld [vmem:[#allocation2 + $0x30] sm:$0xff]
        %v716 = vld [vmem:[#allocation2 + $0x38] sm:$0xf]
        %v717 = vld [vmem:[#allocation2 + $0x3c] sm:$0xff]
        %v718 = vld [vmem:[#allocation2 + $0x44] sm:$0xf]
        %v719 = vld [vmem:[#allocation2 + $0x48] sm:$0xff]
        %v720 = vld [vmem:[#allocation2 + $0x50] sm:$0xf]
        %v721 = vld [vmem:[#allocation2 + $0x54] sm:$0xff]
        %v722 = vld [vmem:[#allocation2 + $0x5c] sm:$0xf]
        %v723 = vld [vmem:[#allocation2 + $0x60] sm:$0xff]
        %v724 = vld [vmem:[#allocation2 + $0x68] sm:$0xf]
        %v725 = vld [vmem:[%s5] sm:$0xff]
        %727 = vset.pattern.permute.xlu0 0
        %728 = vperm.xlu0 %727, %v725
        %v729 = vpop.permute.xlu0 %728
        %v749 = vunpack.c.l.b16 %v707
        %v750 = vunpack.c.h.b16 %v707
        %v751 = vunpack.c.l.b16 %v708
        %v752 = vunpack.c.l.b16 %v709
        %v753 = vunpack.c.h.b16 %v709
        %v754 = vunpack.c.l.b16 %v710
        %v755 = vunpack.c.l.b16 %v711
        %v756 = vunpack.c.h.b16 %v711
        %v757 = vunpack.c.l.b16 %v712
        %v758 = vunpack.c.l.b16 %v713
        %v759 = vunpack.c.h.b16 %v713
        %v760 = vunpack.c.l.b16 %v714
        %v761 = vunpack.c.l.b16 %v715
        %v762 = vunpack.c.h.b16 %v715
        %v763 = vunpack.c.l.b16 %v716
        %v764 = vunpack.c.l.b16 %v717
        %v765 = vunpack.c.h.b16 %v717
        %v766 = vunpack.c.l.b16 %v718
        %v767 = vunpack.c.l.b16 %v719
        %v768 = vunpack.c.h.b16 %v719
        %v769 = vunpack.c.l.b16 %v720
        %v770 = vunpack.c.l.b16 %v721
        %v771 = vunpack.c.h.b16 %v721
        %v772 = vunpack.c.l.b16 %v722
        %v773 = vunpack.c.l.b16 %v723
        %v774 = vunpack.c.h.b16 %v723
        %v775 = vunpack.c.l.b16 %v724
        %v776 = vpack.c.b16 %v752, %v749
        %v777 = vpack.c.b16 %v753, %v750
        %v778 = vpack.c.b16 %v754, %v751
        %v779 = vpack.c.b16 %v758, %v755
        %v780 = vpack.c.b16 %v759, %v756
        %v781 = vpack.c.b16 %v760, %v757
        %v782 = vpack.c.b16 %v764, %v761
        %v783 = vpack.c.b16 %v765, %v762
        %v784 = vpack.c.b16 %v766, %v763
        %v785 = vpack.c.b16 %v770, %v767
        %v786 = vpack.c.b16 %v771, %v768
        %v787 = vpack.c.b16 %v772, %v769
        %v788 = vpack.c.b16 %v773, %v773
        %v789 = vpack.c.b16 %v774, %v774
        %v790 = vpack.c.b16 %v775, %v775
        %v804 = vsel %vm483, %v706, 0
        %v807 = vsel %vm487, %v788, 0
        %v810 = vsel %vm487, %v789, 0
        %v813 = vsel %vm487, %v790, 0
        %815 = vmatpush.bf16.msra.mxu0 0
        %816 = vmatpush.bf16.msra.mxu0 0
        %817 = vmatpush.bf16.msra.mxu0 0
        %818 = vmatpush.bf16.msra.mxu0 %v807
        %819 = vmatpush.bf16.msra.mxu0 %v785
        %820 = vmatpush.bf16.msra.mxu0 %v782
        %821 = vmatpush.bf16.msra.mxu0 %v779
        %822 = vmatpush.bf16.msra.mxu0 %v776
        %823 = vmatmul.bf16.gmra.mxu0 %v804
        %v824 = vpop.f32.mrf.mxu0
        %v825 = vadd.f32 %v729, %v824
        %v826 = vpop.f32.mrf.mxu0
        %827 = vdwg.mxu0
        %828 = vmatpush.bf16.msra.mxu0 0
        %829 = vmatpush.bf16.msra.mxu0 0
        %830 = vmatpush.bf16.msra.mxu0 0
        %831 = vmatpush.bf16.msra.mxu0 %v810
        %832 = vmatpush.bf16.msra.mxu0 %v786
        %833 = vmatpush.bf16.msra.mxu0 %v783
        %834 = vmatpush.bf16.msra.mxu0 %v780
        %835 = vmatpush.bf16.msra.mxu0 %v777
        %836 = vmatmul.bf16.gmra.mxu0 %v804
        %v837 = vpop.f32.mrf.mxu0
        %v838 = vadd.f32 %v729, %v837
        %v839 = vpop.f32.mrf.mxu0
        %840 = vdwg.mxu0
        %841 = vmatpush.bf16.msra.mxu0 0
        %842 = vmatpush.bf16.msra.mxu0 0
        %843 = vmatpush.bf16.msra.mxu0 0
        %844 = vmatpush.bf16.msra.mxu0 %v813
        %845 = vmatpush.bf16.msra.mxu0 %v787
        %846 = vmatpush.bf16.msra.mxu0 %v784
        %847 = vmatpush.bf16.msra.mxu0 %v781
        %848 = vmatpush.bf16.msra.mxu0 %v778
        %849 = vmatmul.bf16.gmra.mxu0 %v804
        %v850 = vpop.f32.mrf.mxu0
        %v851 = vadd.f32 %v729, %v850
        %v852 = vpop.f32.mrf.mxu0
        %853 = vdwg.mxu0
        %857 = vrot.lane.b32.xlu0 %v825, 19
        %v858 = vpop.permute.xlu0 %857
        %859 = vrot.lane.b32.xlu0 %v838, 19
        %v860 = vpop.permute.xlu0 %859
        %861 = vrot.lane.b32.xlu0 %v851, 19
        %v862 = vpop.permute.xlu0 %861
        %vm863 = vcmask 154624
        %v864 = vsel %vm863, %v858, %v860
        %v865 = vsel %vm863, %v860, %v862
        %v869 = vadd.f32 %v271, %v858
        %v870 = vadd.f32 %v272, %v864
        %v871 = vadd.f32 %v273, %v865
        %875 = vrot.lane.b32.xlu0 %v869, 109
        %v876 = vpop.permute.xlu0 %875
        %877 = vrot.lane.b32.xlu0 %v870, 109
        %v878 = vpop.permute.xlu0 %877
        %879 = vrot.lane.b32.xlu0 %v871, 109
        %v880 = vpop.permute.xlu0 %879
        %vm881 = vcmask 891904
        %v882 = vsel %vm881, %v876, %v878
        %v883 = vsel %vm881, %v878, %v880
        %887 = vst [vmem:[%s269] sm:$0xff] %v882
        %888 = vst [vmem:[%s269 + $0x8] sm:$0xff] %v883
        %vm889 = vcmask 556032
        %890 = vst.msk [vmem:[%s269 + $0x10] sm:$0xff] %vm889, %v880
        %s891 = sand.u32 %s162, 1
        %s892 = scalar_lea.sflag [#allocation6], %s891
        %s893 = sand.u32 %s162, 1
        %s894 = smul.addr %s893, 24
        %s895 = scalar_lea.vmem [#allocation7], %s894
        // Predicated region
        $region49: #{tpu_custom_call.1} parent=43 // pred_check
          %p896 = pneg %p172
        $region50: #{tpu_custom_call.1} parent=43 // pred_check_branch
          %898 = sbr.rel (%p896) target = $region52
        $region51: #{tpu_custom_call.1} parent=43 // pred_region
          %900 = vsyncadd %s892, 0
          %s901 = smul.addr %s23, 3
          %s902 = smul.addr %s901, 8
          %s903 = scalar_lea.hbm %s6, %s902
          %s905 = sshll.u32 %s895, 4
          %s906 = int_to_ptr.vmem [resolvable:$true] %s905
          %s907 = sshll.u32 %s903, 4
          %s908 = int_to_ptr.hbm [resolvable:$true] %s907
          %910 = dma.vmem_to_hbm [thread:$0]  %s906, 384, %s908, %s892
        $region52: #{tpu_custom_call.1} parent=43 // pred_fallthru
          _
      $region44: #{tpu_custom_call.1} parent=5 // pred_fallthru
        _
      %p911 = scmp.le.s32.totalorder 2, %s18
      // Predicated region
      $region53: #{tpu_custom_call.1} parent=5 // pred_check
        %p912 = pneg %p911
      $region54: #{tpu_custom_call.1} parent=5 // pred_check_branch
        %914 = sbr.rel (%p912) target = $region56
      $region55: #{tpu_custom_call.1} parent=5 // pred_region
        %s915 = ssub.s32 %s18, 2
        // Predicated region
        $region57: #{tpu_custom_call.1} parent=55 // pred_check
          %p916 = pneg %p178
        $region58: #{tpu_custom_call.1} parent=55 // pred_check_branch
          %918 = sbr.rel (%p916) target = $region60
        $region59: #{tpu_custom_call.1} parent=55 // pred_region
          %s919 = sand.u32 %s163, 1
          %s920 = scalar_lea.sflag [#allocation6], %s919
          %s921 = sand.u32 %s163, 1
          %s922 = smul.addr %s921, 24
          %s923 = scalar_lea.vmem [#allocation7], %s922
          %925 = dma.done %s920, 384
        $region60: #{tpu_custom_call.1} parent=55 // pred_fallthru
          _
      $region56: #{tpu_custom_call.1} parent=5 // pred_fallthru
        _
    $region6: #{tpu_custom_call.1} parent=1 // loop_footer
      %s22 = sadd.s32 1, %s18
    $region7: #{tpu_custom_call.1} parent=1 // loop_footer_branch
      %17 = sbr.rel target = $region3
    $region8: #{tpu_custom_call.1} parent=1 // loop_exit
      _
    %926 = vsyncpa [#allocation5], 1
    %s927 = scalar_lea.sflag [#allocation5], 1
    %928 = vsyncpa %s927, 1
    %929 = vsyncpa [#allocation6], 1
    %s930 = scalar_lea.sflag [#allocation6], 1
    %931 = vsyncpa %s930, 1

</llo_original>
